<compile_context>
chip_gen: v7x
topology: tpu7x:2x2x1
jax: 0.10.0
libtpu: 0.0.40
codegen_flags: <defaults>
</compile_context>

<pallas_src>
import jax
import jax.numpy as jnp
from jax.experimental import pallas as pl
from jax.experimental.pallas import tpu as pltpu


_BLOCK_ROWS = 8  # G: output rows gathered per grid step (f32 sublane multiple)
# Conservative resident-table budget: table may be double-buffered by the
# pipeliner; must fit v5e/v6e/v7x scoped VMEM with the output blocks on top.
_RESIDENT_VMEM_BUDGET = 24 * 1024 * 1024
_VMEM_LIMIT_BYTES = 32 * 1024 * 1024  # <= physical VMEM on all of v5e/v6e/v7x


def _resident_gather_kernel(ids_ref, table_ref, out_ref):
    """Fast path: whole table resident in VMEM; gather G rows per grid step."""
    g_rows = out_ref.shape[0]
    base = pl.program_id(0) * g_rows
    for g in range(g_rows):  # small static unroll (G = 8)
        row = ids_ref[base + g]
        out_ref[pl.ds(g, 1), :] = table_ref[pl.ds(row, 1), :]


def _dma_gather_kernel(ids_ref, table_hbm, out_ref, row_buf, sem):
    """Fallback: table stays in HBM; keep G row DMAs in flight per grid step."""
    g_rows = out_ref.shape[0]
    base = pl.program_id(0) * g_rows
    # Issue all G row copies before waiting on any -> G DMAs in flight.
    for g in range(g_rows):
        row = ids_ref[base + g]
        pltpu.make_async_copy(table_hbm.at[row], row_buf.at[g], sem.at[g]).start()
    for g in range(g_rows):
        row = ids_ref[base + g]
        pltpu.make_async_copy(table_hbm.at[row], row_buf.at[g], sem.at[g]).wait()
    out_ref[...] = row_buf[...]


def junction_encoder_forward(junction_ids: jax.Array,
                             embedding_table: jax.Array,
                             *,
                             use_resident: bool | None = None) -> jax.Array:
    """Pallas equivalent of JunctionEncoder.forward.

    junction_ids:    int   [N]
    embedding_table: float [num_junctions, num_feature]
    returns:         float [N, num_feature]
    """
    n = junction_ids.shape[0]
    num_junctions, num_feature = embedding_table.shape
    dtype = embedding_table.dtype
    itemsize = jnp.dtype(dtype).itemsize

    # TODO(synk): PyTorch nn.Embedding raises on out-of-range ids; here ids are
    # clamped into range instead of raising.
    ids = jnp.clip(junction_ids.astype(jnp.int32), 0, num_junctions - 1)

    # Pad the id list so the grid divides evenly; padded rows gather row 0 and
    # are sliced off on return.
    g = _BLOCK_ROWS
    n_pad = ((n + g - 1) // g) * g
    if n_pad != n:
        ids = jnp.pad(ids, (0, n_pad - n))
    num_blocks = n_pad // g

    table_bytes = num_junctions * num_feature * itemsize
    out_block_bytes = g * num_feature * itemsize
    if use_resident is None:
        use_resident = (2 * table_bytes + 2 * out_block_bytes
                        <= _RESIDENT_VMEM_BUDGET)

    cost = pl.CostEstimate(
        flops=0,
        transcendentals=0,
        # read gathered rows + write output (+ the id vector itself)
        bytes_accessed=int(2 * n_pad * num_feature * itemsize + n_pad * 4),
    )

    out_spec = pl.BlockSpec((g, num_feature), lambda i, ids_ref: (i, 0))

    if use_resident:
        grid_spec = pltpu.PrefetchScalarGridSpec(
            num_scalar_prefetch=1,          # ids -> SMEM, visible to index_maps + body
            grid=(num_blocks,),
            in_specs=[
                # Full table with a constant index_map -> stays resident in VMEM.
                pl.BlockSpec((num_junctions, num_feature),
                             lambda i, ids_ref: (0, 0)),
            ],
            out_specs=out_spec,
        )
        kernel = _resident_gather_kernel
    else:
        grid_spec = pltpu.PrefetchScalarGridSpec(
            num_scalar_prefetch=1,
            grid=(num_blocks,),
            in_specs=[pl.BlockSpec(memory_space=pl.ANY)],  # table stays in HBM
            out_specs=out_spec,
            scratch_shapes=[
                pltpu.VMEM((g, num_feature), dtype),       # gathered-row staging
                pltpu.SemaphoreType.DMA((g,)),              # one sem per in-flight row
            ],
        )
        kernel = _dma_gather_kernel

    out_padded = pl.pallas_call(
        kernel,
        out_shape=jax.ShapeDtypeStruct((n_pad, num_feature), dtype),
        grid_spec=grid_spec,
        compiler_params=pltpu.CompilerParams(
            # Each grid step writes a distinct output block -> shard across
            # TensorCores on megacore parts (v7x); no-op on v5e/v6e.
            dimension_semantics=("parallel",),
            vmem_limit_bytes=_VMEM_LIMIT_BYTES,
        ),
        cost_estimate=cost,
    )(ids, embedding_table)

    return out_padded[:n] if n_pad != n else out_padded


if __name__ == "__main__":
    num_junctions = 16
    num_feature = 32
    n_ids = 8

    key = jax.random.PRNGKey(0)
    k_table, k_ids = jax.random.split(key)

    # Deterministic "nn.Embedding" weight init (N(0,1), PyTorch default).
    embedding_table = jax.random.normal(
        k_table, (num_junctions, num_feature), dtype=jnp.float32
    )
    junction_ids = jax.random.randint(
        k_ids, (n_ids,), minval=0, maxval=num_junctions, dtype=jnp.int32
    )
    ref = embedding_table[junction_ids]

    # Fast path: table resident in VMEM.
    out_resident = jax.block_until_ready(
        junction_encoder_forward(junction_ids, embedding_table)
    )
    assert out_resident.shape == (n_ids, num_feature)
    assert jnp.array_equal(out_resident, ref), "resident path mismatch"

    # Large-table fallback path: batched manual HBM row-DMA gather.
    out_dma = jax.block_until_ready(
        junction_encoder_forward(junction_ids, embedding_table, use_resident=False)
    )
    assert jnp.array_equal(out_dma, ref), "DMA-gather path mismatch"

    # Ragged length (exercises the n % G tail padding/slicing).
    ids_tail = jax.random.randint(
        jax.random.PRNGKey(1), (11,), minval=0, maxval=num_junctions,
        dtype=jnp.int32)
    out_tail = jax.block_until_ready(
        junction_encoder_forward(ids_tail, embedding_table)
    )
    assert out_tail.shape == (11, num_feature)
    assert jnp.array_equal(out_tail, embedding_table[ids_tail]), "tail mismatch"

    print("KERNEL_OK")
</pallas_src>

<mosaic_0001>
module attributes {stable_mosaic.version = 11 : i64} {
  func.func @_resident_gather_kernel(%arg0: i32, %arg1: memref<8xi32, #tpu.memory_space<smem>>, %arg2: memref<16x32xf32, #tpu.memory_space<vmem>>, %arg3: memref<8x32xf32, #tpu.memory_space<vmem>>) attributes {dimension_semantics = [#tpu.dimension_semantics<parallel>], iteration_bounds = array<i64: 1>, scalar_prefetch = 1 : i64, scratch_operands = 0 : i64, tpu.core_type = #tpu.core_type<tc>, window_params = [{pipeline_mode = #tpu.pipeline_mode<synchronous>, transform_indices = @transform_0, window_bounds = array<i64: 16, 32>}, {transform_indices = @transform_1, window_bounds = array<i64: 8, 32>}]} {
    %c8_i32 = arith.constant 8 : i32
    %0 = arith.muli %arg0, %c8_i32 : i32
    %c0_i32 = arith.constant 0 : i32
    %1 = arith.addi %0, %c0_i32 : i32
    %2 = arith.index_cast %1 : i32 to index
    %3 = memref.load %arg1[%2] : memref<8xi32, #tpu.memory_space<smem>>
    %4 = arith.index_cast %3 : i32 to index
    %c0 = arith.constant 0 : index
    %5 = vector.load %arg2[%4, %c0] : memref<16x32xf32, #tpu.memory_space<vmem>>, vector<1x32xf32>
    %c0_0 = arith.constant 0 : index
    %c0_1 = arith.constant 0 : index
    %6 = vector.load %arg3[%c0_0, %c0_1] : memref<8x32xf32, #tpu.memory_space<vmem>>, vector<1x32xf32>
    tpu.vector_store %arg3[%c0_0, %c0_1], %5 {strides = array<i32>} : memref<8x32xf32, #tpu.memory_space<vmem>>, vector<1x32xf32>,
    %c1_i32 = arith.constant 1 : i32
    %7 = arith.addi %0, %c1_i32 : i32
    %8 = arith.index_cast %7 : i32 to index
    %9 = memref.load %arg1[%8] : memref<8xi32, #tpu.memory_space<smem>>
    %10 = arith.index_cast %9 : i32 to index
    %c0_2 = arith.constant 0 : index
    %11 = vector.load %arg2[%10, %c0_2] : memref<16x32xf32, #tpu.memory_space<vmem>>, vector<1x32xf32>
    %c1 = arith.constant 1 : index
    %c0_3 = arith.constant 0 : index
    %12 = vector.load %arg3[%c1, %c0_3] : memref<8x32xf32, #tpu.memory_space<vmem>>, vector<1x32xf32>
    tpu.vector_store %arg3[%c1, %c0_3], %11 {strides = array<i32>} : memref<8x32xf32, #tpu.memory_space<vmem>>, vector<1x32xf32>,
    %c2_i32 = arith.constant 2 : i32
    %13 = arith.addi %0, %c2_i32 : i32
    %14 = arith.index_cast %13 : i32 to index
    %15 = memref.load %arg1[%14] : memref<8xi32, #tpu.memory_space<smem>>
    %16 = arith.index_cast %15 : i32 to index
    %c0_4 = arith.constant 0 : index
    %17 = vector.load %arg2[%16, %c0_4] : memref<16x32xf32, #tpu.memory_space<vmem>>, vector<1x32xf32>
    %c2 = arith.constant 2 : index
    %c0_5 = arith.constant 0 : index
    %18 = vector.load %arg3[%c2, %c0_5] : memref<8x32xf32, #tpu.memory_space<vmem>>, vector<1x32xf32>
    tpu.vector_store %arg3[%c2, %c0_5], %17 {strides = array<i32>} : memref<8x32xf32, #tpu.memory_space<vmem>>, vector<1x32xf32>,
    %c3_i32 = arith.constant 3 : i32
    %19 = arith.addi %0, %c3_i32 : i32
    %20 = arith.index_cast %19 : i32 to index
    %21 = memref.load %arg1[%20] : memref<8xi32, #tpu.memory_space<smem>>
    %22 = arith.index_cast %21 : i32 to index
    %c0_6 = arith.constant 0 : index
    %23 = vector.load %arg2[%22, %c0_6] : memref<16x32xf32, #tpu.memory_space<vmem>>, vector<1x32xf32>
    %c3 = arith.constant 3 : index
    %c0_7 = arith.constant 0 : index
    %24 = vector.load %arg3[%c3, %c0_7] : memref<8x32xf32, #tpu.memory_space<vmem>>, vector<1x32xf32>
    tpu.vector_store %arg3[%c3, %c0_7], %23 {strides = array<i32>} : memref<8x32xf32, #tpu.memory_space<vmem>>, vector<1x32xf32>,
    %c4_i32 = arith.constant 4 : i32
    %25 = arith.addi %0, %c4_i32 : i32
    %26 = arith.index_cast %25 : i32 to index
    %27 = memref.load %arg1[%26] : memref<8xi32, #tpu.memory_space<smem>>
    %28 = arith.index_cast %27 : i32 to index
    %c0_8 = arith.constant 0 : index
    %29 = vector.load %arg2[%28, %c0_8] : memref<16x32xf32, #tpu.memory_space<vmem>>, vector<1x32xf32>
    %c4 = arith.constant 4 : index
    %c0_9 = arith.constant 0 : index
    %30 = vector.load %arg3[%c4, %c0_9] : memref<8x32xf32, #tpu.memory_space<vmem>>, vector<1x32xf32>
    tpu.vector_store %arg3[%c4, %c0_9], %29 {strides = array<i32>} : memref<8x32xf32, #tpu.memory_space<vmem>>, vector<1x32xf32>,
    %c5_i32 = arith.constant 5 : i32
    %31 = arith.addi %0, %c5_i32 : i32
    %32 = arith.index_cast %31 : i32 to index
    %33 = memref.load %arg1[%32] : memref<8xi32, #tpu.memory_space<smem>>
    %34 = arith.index_cast %33 : i32 to index
    %c0_10 = arith.constant 0 : index
    %35 = vector.load %arg2[%34, %c0_10] : memref<16x32xf32, #tpu.memory_space<vmem>>, vector<1x32xf32>
    %c5 = arith.constant 5 : index
    %c0_11 = arith.constant 0 : index
    %36 = vector.load %arg3[%c5, %c0_11] : memref<8x32xf32, #tpu.memory_space<vmem>>, vector<1x32xf32>
    tpu.vector_store %arg3[%c5, %c0_11], %35 {strides = array<i32>} : memref<8x32xf32, #tpu.memory_space<vmem>>, vector<1x32xf32>,
    %c6_i32 = arith.constant 6 : i32
    %37 = arith.addi %0, %c6_i32 : i32
    %38 = arith.index_cast %37 : i32 to index
    %39 = memref.load %arg1[%38] : memref<8xi32, #tpu.memory_space<smem>>
    %40 = arith.index_cast %39 : i32 to index
    %c0_12 = arith.constant 0 : index
    %41 = vector.load %arg2[%40, %c0_12] : memref<16x32xf32, #tpu.memory_space<vmem>>, vector<1x32xf32>
    %c6 = arith.constant 6 : index
    %c0_13 = arith.constant 0 : index
    %42 = vector.load %arg3[%c6, %c0_13] : memref<8x32xf32, #tpu.memory_space<vmem>>, vector<1x32xf32>
    tpu.vector_store %arg3[%c6, %c0_13], %41 {strides = array<i32>} : memref<8x32xf32, #tpu.memory_space<vmem>>, vector<1x32xf32>,
    %c7_i32 = arith.constant 7 : i32
    %43 = arith.addi %0, %c7_i32 : i32
    %44 = arith.index_cast %43 : i32 to index
    %45 = memref.load %arg1[%44] : memref<8xi32, #tpu.memory_space<smem>>
    %46 = arith.index_cast %45 : i32 to index
    %c0_14 = arith.constant 0 : index
    %47 = vector.load %arg2[%46, %c0_14] : memref<16x32xf32, #tpu.memory_space<vmem>>, vector<1x32xf32>
    %c7 = arith.constant 7 : index
    %c0_15 = arith.constant 0 : index
    %48 = vector.load %arg3[%c7, %c0_15] : memref<8x32xf32, #tpu.memory_space<vmem>>, vector<1x32xf32>
    tpu.vector_store %arg3[%c7, %c0_15], %47 {strides = array<i32>} : memref<8x32xf32, #tpu.memory_space<vmem>>, vector<1x32xf32>,
    return
  }
  func.func @transform_0(%arg0: i32, %arg1: memref<8xi32, #tpu.memory_space<smem>>) -> (i32, i32) {
    %c0_i32 = arith.constant 0 : i32
    %c0_i32_0 = arith.constant 0 : i32
    %c0_i32_1 = arith.constant 0 : i32
    return %c0_i32, %c0_i32_0 : i32, i32
  }
  func.func @transform_1(%arg0: i32, %arg1: memref<8xi32, #tpu.memory_space<smem>>) -> (i32, i32) {
    %c0_i32 = arith.constant 0 : i32
    %c0_i32_0 = arith.constant 0 : i32
    return %arg0, %c0_i32 : i32, i32
  }
}

</mosaic_0001>

<llo_original>
// kernel: tpu_custom_call.1
$region0: #{tpu_custom_call.1}
  #allocation0 [shape = 'u32[]', space=smem, size = 0x4, offset = 0x4, fixed_abs, tag = 'smem constant byte address 0x4 - core index']
  #allocation1 [shape = 'u32[144,128]{1,0:T(1,128)}', space=vmem, size = 0x12000, scoped, tag = 'internal scratch']
  #allocation2 [shape = 's32[1]{0}', space=sflag, size = 0x4, scoped, tag = 'scoped memory for tpu_custom_call.1']
  #allocation3 [shape = 'u8[512]{0}', space=smem, size = 0x200, scoped, tag = 'prefetched SMEM operand 0']
  %s0 = inlined_call_operand.hbm [shape: s32[8], index: 0, kind: input, shape index: {}]
  %s1 = inlined_call_operand.hbm [shape: f32[16,32], index: 1, kind: input, shape index: {}]
  %s2 = inlined_call_operand.hbm [shape: f32[8,32], index: 2, kind: output, shape index: {}]
  %s3 = sld [smem:[#allocation0]]
  $region18: #{tpu_custom_call.1} parent=0
    _
  %s5 = ssub.s32 1, %s3
  %s6 = scalar_select 0, %s5, %s3
  %8 = dma.hbm_to_smem %s0, 16, [#allocation3], [#allocation2]
  %9 = dma.done [#allocation2], 16
  %10 = sfence
  $region1: #{tpu_custom_call.1} parent=0
    #allocation4 [shape = 'u8[8192]{0}', space=vmem, size = 0x2000, scoped, tag = 'input window, operand 1, single buffered']
    #allocation5 [shape = 's32[1]{0}', space=sflag, size = 0x4, scoped, tag = 'scoped memory for tpu_custom_call.1']
    #allocation6 [shape = 's32[1]{0}', space=sflag, size = 0x4, scoped, tag = 'scoped memory for tpu_custom_call.1']
    #allocation7 [shape = 'u8[4096]{0}', space=vmem, size = 0x1000, scoped, tag = 'output window, operand 0, single buffered']
    %11 = vsyncpa [#allocation5], 0
    %12 = vsyncpa [#allocation6], 0
    // Predicated region
    $region2: #{tpu_custom_call.1} parent=1 // pred_check
      _
    $region3: #{tpu_custom_call.1} parent=1 // pred_check_branch
      %14 = sbr.rel (0) target = $region5
    $region4: #{tpu_custom_call.1} parent=1 // pred_region
      %s16 = ssub.s32 256, 256
      %17 = vsyncadd [#allocation5], %s16
      %s18 = sshll.u32 [#allocation4], 4
      %s19 = int_to_ptr.vmem [resolvable:$true] %s18
      %24 = dma.hbm_to_vmem [thread:$0]  %s1, 256, %s19, [#allocation5], 128, 128, 8
    $region5: #{tpu_custom_call.1} parent=1 // pred_fallthru
      _
    // Predicated region
    $region6: #{tpu_custom_call.1} parent=1 // pred_check
      _
    $region7: #{tpu_custom_call.1} parent=1 // pred_check_branch
      %26 = sbr.rel (0) target = $region9
    $region8: #{tpu_custom_call.1} parent=1 // pred_region
      %27 = dma.done [#allocation5], 256
    $region9: #{tpu_custom_call.1} parent=1 // pred_fallthru
      _
    %s28 = smul.u32 0, 8
    %s29 = sld [smem:[#allocation3 + %s28]]
    %s30 = scalar_lea.vmem [#allocation4], %s29
    %v31 = vld [vmem:[%s30] sm:$0x1]
    %vm32 = vcmask 253952
    %33 = vst.msk [vmem:[#allocation7] sm:$0x1] %vm32, %v31
    %s34 = sadd.s32 %s28, 1
    %s35 = sld [smem:[#allocation3 + %s34]]
    %s36 = scalar_lea.vmem [#allocation4], %s35
    %v37 = vld [vmem:[%s36] sm:$0x1]
    %38 = vst.msk [vmem:[#allocation7 + $0x1] sm:$0x1] %vm32, %v37
    %s39 = sadd.s32 %s28, 2
    %s40 = sld [smem:[#allocation3 + %s39]]
    %s41 = scalar_lea.vmem [#allocation4], %s40
    %v42 = vld [vmem:[%s41] sm:$0x1]
    %43 = vst.msk [vmem:[#allocation7 + $0x2] sm:$0x1] %vm32, %v42
    %s44 = sadd.s32 %s28, 3
    %s45 = sld [smem:[#allocation3 + %s44]]
    %s46 = scalar_lea.vmem [#allocation4], %s45
    %v47 = vld [vmem:[%s46] sm:$0x1]
    %48 = vst.msk [vmem:[#allocation7 + $0x3] sm:$0x1] %vm32, %v47
    %s49 = sadd.s32 %s28, 4
    %s50 = sld [smem:[#allocation3 + %s49]]
    %s51 = scalar_lea.vmem [#allocation4], %s50
    %v52 = vld [vmem:[%s51] sm:$0x1]
    %53 = vst.msk [vmem:[#allocation7 + $0x4] sm:$0x1] %vm32, %v52
    %s54 = sadd.s32 %s28, 5
    %s55 = sld [smem:[#allocation3 + %s54]]
    %s56 = scalar_lea.vmem [#allocation4], %s55
    %v57 = vld [vmem:[%s56] sm:$0x1]
    %58 = vst.msk [vmem:[#allocation7 + $0x5] sm:$0x1] %vm32, %v57
    %s59 = sadd.s32 %s28, 6
    %s60 = sld [smem:[#allocation3 + %s59]]
    %s61 = scalar_lea.vmem [#allocation4], %s60
    %v62 = vld [vmem:[%s61] sm:$0x1]
    %63 = vst.msk [vmem:[#allocation7 + $0x6] sm:$0x1] %vm32, %v62
    %s64 = sadd.s32 %s28, 7
    %s65 = sld [smem:[#allocation3 + %s64]]
    %s66 = scalar_lea.vmem [#allocation4], %s65
    %v67 = vld [vmem:[%s66] sm:$0x1]
    %68 = vst.msk [vmem:[#allocation7 + $0x7] sm:$0x1] %vm32, %v67
    // Predicated region
    $region10: #{tpu_custom_call.1} parent=1 // pred_check
      _
    $region11: #{tpu_custom_call.1} parent=1 // pred_check_branch
      %70 = sbr.rel (0) target = $region13
    $region12: #{tpu_custom_call.1} parent=1 // pred_region
      %s72 = ssub.s32 128, 128
      %73 = vsyncadd [#allocation6], %s72
      %s75 = sshll.u32 [#allocation7], 4
      %s76 = int_to_ptr.vmem [resolvable:$true] %s75
      %78 = dma.vmem_to_hbm [thread:$0]  %s76, 128, %s2, [#allocation6]
    $region13: #{tpu_custom_call.1} parent=1 // pred_fallthru
      _
    // Predicated region
    $region14: #{tpu_custom_call.1} parent=1 // pred_check
      _
    $region15: #{tpu_custom_call.1} parent=1 // pred_check_branch
      %80 = sbr.rel (0) target = $region17
    $region16: #{tpu_custom_call.1} parent=1 // pred_region
      %81 = dma.done [#allocation6], 128
    $region17: #{tpu_custom_call.1} parent=1 // pred_fallthru
      _
    %82 = vsyncpa [#allocation5], 1
    %83 = vsyncpa [#allocation6], 1

</llo_original>
